<compile_context>
chip_gen: v5e
topology: v5e:2x2
jax: 0.10.0
libtpu: 0.0.40
codegen_flags: <defaults>
</compile_context>

<pallas_src>
import functools

import jax
import jax.numpy as jnp
from jax.experimental import pallas as pl
from jax.experimental.pallas import tpu as pltpu

VEC_LENGTH = 512
HIDDEN = VEC_LENGTH // 2     # 256
NUM_CLASSES = 2
OUT_PAD = 128                # lane-dense padded output width
DEFAULT_BLOCK_B = 512        # batch tile (multiple of 8; safe for v7x VMEM)


def _round_up(x, m):
    return ((x + m - 1) // m) * m


def _mlp_kernel(x_ref, w1_ref, b1_ref, w2_ref, b2_ref, o_ref):
    # Layer 1: bf16 MXU matmul with f32 accumulation: [TB,512] @ [512,256]
    h = jnp.dot(x_ref[...], w1_ref[...], preferred_element_type=jnp.float32)
    # Bias + ReLU in f32 on the VPU.
    h = jnp.maximum(h + b1_ref[...], 0.0)
    # Layer 2: bf16 MXU matmul with f32 accumulation: [TB,256] @ [256,128]
    out = jnp.dot(h.astype(jnp.bfloat16), w2_ref[...],
                  preferred_element_type=jnp.float32)
    o_ref[...] = (out + b2_ref[...]).astype(o_ref.dtype)


@functools.partial(jax.jit, static_argnames=("block_b",))
def linear_classifier_forward(x, w1, b1, w2, b2, *, block_b=DEFAULT_BLOCK_B):
    """Forward pass of LinearClassifier: Linear(512,256) -> ReLU -> Linear(256,2)."""
    B = x.shape[0]

    # Tile size: multiple of 8, no larger than needed for small batches.
    TB = min(block_b, _round_up(B, 8))
    Bp = _round_up(B, TB)
    if Bp != B:
        x = jnp.pad(x, ((0, Bp - B), (0, 0)))

    # Pad the 2-wide classifier head to a full 128-lane output block so the
    # final store is unmasked and the second matmul has a non-degenerate N.
    w2p = jnp.zeros((HIDDEN, OUT_PAD), jnp.float32).at[:, :NUM_CLASSES].set(w2)
    b2p = jnp.zeros((1, OUT_PAD), jnp.float32).at[:, :NUM_CLASSES].set(b2)

    # Feed the MXU bf16; accumulation stays f32 inside the kernel.
    x_bf = x.astype(jnp.bfloat16)
    w1_bf = w1.astype(jnp.bfloat16)
    w2_bf = w2p.astype(jnp.bfloat16)

    grid = (Bp // TB,)

    flops = 2 * Bp * VEC_LENGTH * HIDDEN + 2 * Bp * HIDDEN * OUT_PAD
    bytes_accessed = (
        Bp * VEC_LENGTH * 2            # x (bf16)
        + VEC_LENGTH * HIDDEN * 2      # w1 (bf16)
        + HIDDEN * OUT_PAD * 2         # w2 (bf16)
        + HIDDEN * 4 + OUT_PAD * 4     # biases (f32)
        + Bp * OUT_PAD * 4             # output (f32)
    )

    out = pl.pallas_call(
        _mlp_kernel,
        out_shape=jax.ShapeDtypeStruct((Bp, OUT_PAD), jnp.float32),
        grid=grid,
        in_specs=[
            pl.BlockSpec((TB, VEC_LENGTH), lambda i: (i, 0)),     # streamed
            pl.BlockSpec((VEC_LENGTH, HIDDEN), lambda i: (0, 0)),  # resident
            pl.BlockSpec((1, HIDDEN), lambda i: (0, 0)),           # resident
            pl.BlockSpec((HIDDEN, OUT_PAD), lambda i: (0, 0)),     # resident
            pl.BlockSpec((1, OUT_PAD), lambda i: (0, 0)),          # resident
        ],
        out_specs=pl.BlockSpec((TB, OUT_PAD), lambda i: (i, 0)),
        compiler_params=pltpu.CompilerParams(
            dimension_semantics=("parallel",),
        ),
        cost_estimate=pl.CostEstimate(
            flops=flops, transcendentals=0, bytes_accessed=bytes_accessed),
    )(x_bf, w1_bf, b1, w2_bf, b2p)

    # Strip batch padding and the lane padding of the classifier head.
    return out[:B, :NUM_CLASSES]


def init_params(key):
    """Deterministic parameter init (Kaiming-uniform-like, matching nn.Linear shapes)."""
    k1, k2, k3, k4 = jax.random.split(key, 4)
    bound1 = 1.0 / (VEC_LENGTH ** 0.5)
    bound2 = 1.0 / (HIDDEN ** 0.5)
    # stored as (in, out); equivalent to PyTorch's (out, in) transposed
    w1 = jax.random.uniform(k1, (VEC_LENGTH, HIDDEN), jnp.float32, -bound1, bound1)
    b1 = jax.random.uniform(k2, (1, HIDDEN), jnp.float32, -bound1, bound1)
    w2 = jax.random.uniform(k3, (HIDDEN, NUM_CLASSES), jnp.float32, -bound2, bound2)
    b2 = jax.random.uniform(k4, (1, NUM_CLASSES), jnp.float32, -bound2, bound2)
    return w1, b1, w2, b2


def _reference(x, w1, b1, w2, b2):
    return jnp.maximum(x @ w1 + b1, 0.0) @ w2 + b2


if __name__ == "__main__":
    key = jax.random.PRNGKey(0)
    k_x, k_x2, k_p = jax.random.split(key, 3)
    w1, b1, w2, b2 = init_params(k_p)

    # Small batch (single tile).
    B = 8
    x = jax.random.normal(k_x, (B, VEC_LENGTH), jnp.float32)
    out = jax.block_until_ready(linear_classifier_forward(x, w1, b1, w2, b2))
    ref = _reference(x, w1, b1, w2, b2)
    assert out.shape == (B, NUM_CLASSES)
    # bf16 MXU inputs -> relaxed tolerance vs f32 reference.
    assert jnp.allclose(out, ref, atol=2e-2, rtol=2e-2), "mismatch (B=8)"

    # Non-multiple batch to exercise the remainder/padding path.
    B2 = 37
    x2 = jax.random.normal(k_x2, (B2, VEC_LENGTH), jnp.float32)
    out2 = jax.block_until_ready(linear_classifier_forward(x2, w1, b1, w2, b2))
    ref2 = _reference(x2, w1, b1, w2, b2)
    assert out2.shape == (B2, NUM_CLASSES)
    assert jnp.allclose(out2, ref2, atol=2e-2, rtol=2e-2), "mismatch (B=37)"

    print("KERNEL_OK")
</pallas_src>

<mosaic_0001>
module attributes {stable_mosaic.version = 11 : i64} {
  func.func @_mlp_kernel(%arg0: i32, %arg1: memref<8x512xbf16, #tpu.memory_space<vmem>>, %arg2: memref<512x256xbf16, #tpu.memory_space<vmem>>, %arg3: memref<1x256xf32, #tpu.memory_space<vmem>>, %arg4: memref<256x128xbf16, #tpu.memory_space<vmem>>, %arg5: memref<1x128xf32, #tpu.memory_space<vmem>>, %arg6: memref<8x128xf32, #tpu.memory_space<vmem>>) attributes {dimension_semantics = [#tpu.dimension_semantics<parallel>], iteration_bounds = array<i64: 1>, scalar_prefetch = 0 : i64, scratch_operands = 0 : i64, tpu.core_type = #tpu.core_type<tc>, window_params = [{transform_indices = @transform_0, window_bounds = array<i64: 8, 512>}, {pipeline_mode = #tpu.pipeline_mode<synchronous>, transform_indices = @transform_1, window_bounds = array<i64: 512, 256>}, {pipeline_mode = #tpu.pipeline_mode<synchronous>, transform_indices = @transform_2, window_bounds = array<i64: 1, 256>}, {pipeline_mode = #tpu.pipeline_mode<synchronous>, transform_indices = @transform_3, window_bounds = array<i64: 256, 128>}, {pipeline_mode = #tpu.pipeline_mode<synchronous>, transform_indices = @transform_4, window_bounds = array<i64: 1, 128>}, {transform_indices = @transform_5, window_bounds = array<i64: 8, 128>}]} {
    %c0 = arith.constant 0 : index
    %c0_0 = arith.constant 0 : index
    %0 = vector.load %arg1[%c0, %c0_0] : memref<8x512xbf16, #tpu.memory_space<vmem>>, vector<8x512xbf16>
    %c0_1 = arith.constant 0 : index
    %c0_2 = arith.constant 0 : index
    %1 = vector.load %arg2[%c0_1, %c0_2] : memref<512x256xbf16, #tpu.memory_space<vmem>>, vector<512x256xbf16>
    %cst = arith.constant dense<0.000000e+00> : vector<8x256xf32>
    %2 = tpu.matmul %0, %1, %cst {dimension_numbers = #tpu.dot_dimension_numbers<[1], [0], [0], [1], [0, 0, 1, 1], [], []>} : vector<8x512xbf16>, vector<512x256xbf16>, vector<8x256xf32> -> vector<8x256xf32>
    %c0_3 = arith.constant 0 : index
    %c0_4 = arith.constant 0 : index
    %3 = vector.load %arg3[%c0_3, %c0_4] : memref<1x256xf32, #tpu.memory_space<vmem>>, vector<1x256xf32>
    %4 = vector.broadcast %3 : vector<1x256xf32> to vector<8x256xf32>
    %5 = arith.addf %2, %4 : vector<8x256xf32>
    %cst_5 = arith.constant 0.000000e+00 : f32
    %6 = vector.broadcast %cst_5 : f32 to vector<8x256xf32>
    %7 = arith.maximumf %5, %6 : vector<8x256xf32>
    %8 = arith.truncf %7 : vector<8x256xf32> to vector<8x256xbf16>
    %c0_6 = arith.constant 0 : index
    %c0_7 = arith.constant 0 : index
    %9 = vector.load %arg4[%c0_6, %c0_7] : memref<256x128xbf16, #tpu.memory_space<vmem>>, vector<256x128xbf16>
    %cst_8 = arith.constant dense<0.000000e+00> : vector<8x128xf32>
    %10 = tpu.matmul %8, %9, %cst_8 {dimension_numbers = #tpu.dot_dimension_numbers<[1], [0], [0], [1], [0, 0, 1, 1], [], []>} : vector<8x256xbf16>, vector<256x128xbf16>, vector<8x128xf32> -> vector<8x128xf32>
    %c0_9 = arith.constant 0 : index
    %c0_10 = arith.constant 0 : index
    %11 = vector.load %arg5[%c0_9, %c0_10] : memref<1x128xf32, #tpu.memory_space<vmem>>, vector<1x128xf32>
    %12 = vector.broadcast %11 : vector<1x128xf32> to vector<8x128xf32>
    %13 = arith.addf %10, %12 : vector<8x128xf32>
    %c0_11 = arith.constant 0 : index
    %c0_12 = arith.constant 0 : index
    %14 = vector.load %arg6[%c0_11, %c0_12] : memref<8x128xf32, #tpu.memory_space<vmem>>, vector<8x128xf32>
    tpu.vector_store %arg6[%c0_11, %c0_12], %13 {strides = array<i32>} : memref<8x128xf32, #tpu.memory_space<vmem>>, vector<8x128xf32>,
    return
  }
  func.func @transform_0(%arg0: i32) -> (i32, i32) {
    %c0_i32 = arith.constant 0 : i32
    %c0_i32_0 = arith.constant 0 : i32
    return %arg0, %c0_i32 : i32, i32
  }
  func.func @transform_1(%arg0: i32) -> (i32, i32) {
    %c0_i32 = arith.constant 0 : i32
    %c0_i32_0 = arith.constant 0 : i32
    %c0_i32_1 = arith.constant 0 : i32
    return %c0_i32, %c0_i32_0 : i32, i32
  }
  func.func @transform_2(%arg0: i32) -> (i32, i32) {
    %c0_i32 = arith.constant 0 : i32
    %c0_i32_0 = arith.constant 0 : i32
    %c0_i32_1 = arith.constant 0 : i32
    return %c0_i32, %c0_i32_0 : i32, i32
  }
  func.func @transform_3(%arg0: i32) -> (i32, i32) {
    %c0_i32 = arith.constant 0 : i32
    %c0_i32_0 = arith.constant 0 : i32
    %c0_i32_1 = arith.constant 0 : i32
    return %c0_i32, %c0_i32_0 : i32, i32
  }
  func.func @transform_4(%arg0: i32) -> (i32, i32) {
    %c0_i32 = arith.constant 0 : i32
    %c0_i32_0 = arith.constant 0 : i32
    %c0_i32_1 = arith.constant 0 : i32
    return %c0_i32, %c0_i32_0 : i32, i32
  }
  func.func @transform_5(%arg0: i32) -> (i32, i32) {
    %c0_i32 = arith.constant 0 : i32
    %c0_i32_0 = arith.constant 0 : i32
    return %arg0, %c0_i32 : i32, i32
  }
}

</mosaic_0001>

<llo_original>
// kernel: linear_classifier_forward.1
$region0: #{linear_classifier_forward.1}
  #allocation0 [shape = 'u32[]', space=smem, size = 0x4, offset = 0x4, fixed_abs, tag = 'smem constant byte address 0x4 - core index']
  #allocation1 [shape = 'u32[72,128]{1,0:T(1,128)}', space=vmem, size = 0x9000, scoped, tag = 'internal scratch']
  %s0 = inlined_call_operand.vmem [shape: bf16[8,512], index: 0, kind: input, shape index: {}]
  %s1 = inlined_call_operand.vmem [shape: bf16[512,256], index: 1, kind: input, shape index: {}]
  %s2 = inlined_call_operand.vmem [shape: f32[1,256], index: 2, kind: input, shape index: {}]
  %s3 = inlined_call_operand.vmem [shape: bf16[256,128], index: 3, kind: input, shape index: {}]
  %s4 = inlined_call_operand.vmem [shape: f32[1,128], index: 4, kind: input, shape index: {}]
  %s5 = inlined_call_operand.vmem [shape: f32[8,128], index: 5, kind: output, shape index: {}]
  %s6 = sld [smem:[#allocation0]]
  $region30: #{linear_classifier_forward.1} parent=0
    _
  %s8 = ssub.s32 1, %s6
  %s9 = scalar_select 0, %s8, %s6
  // Predicated region
  $region2: #{linear_classifier_forward.1} parent=0 // pred_check
    _
  $region3: #{linear_classifier_forward.1} parent=0 // pred_check_branch
    %11 = sbr.rel (0) target = $region5
  $region4: #{linear_classifier_forward.1} parent=0 // pred_region
    _
  $region5: #{linear_classifier_forward.1} parent=0 // pred_fallthru
    _
  // Predicated region
  $region6: #{linear_classifier_forward.1} parent=0 // pred_check
    _
  $region7: #{linear_classifier_forward.1} parent=0 // pred_check_branch
    %13 = sbr.rel (0) target = $region9
  $region8: #{linear_classifier_forward.1} parent=0 // pred_region
    _
  $region9: #{linear_classifier_forward.1} parent=0 // pred_fallthru
    _
  // Predicated region
  $region10: #{linear_classifier_forward.1} parent=0 // pred_check
    _
  $region11: #{linear_classifier_forward.1} parent=0 // pred_check_branch
    %15 = sbr.rel (0) target = $region13
  $region12: #{linear_classifier_forward.1} parent=0 // pred_region
    _
  $region13: #{linear_classifier_forward.1} parent=0 // pred_fallthru
    _
  // Predicated region
  $region14: #{linear_classifier_forward.1} parent=0 // pred_check
    _
  $region15: #{linear_classifier_forward.1} parent=0 // pred_check_branch
    %17 = sbr.rel (0) target = $region17
  $region16: #{linear_classifier_forward.1} parent=0 // pred_region
    _
  $region17: #{linear_classifier_forward.1} parent=0 // pred_fallthru
    _
  // Predicated region
  $region18: #{linear_classifier_forward.1} parent=0 // pred_check
    _
  $region19: #{linear_classifier_forward.1} parent=0 // pred_check_branch
    %19 = sbr.rel (0) target = $region21
  $region20: #{linear_classifier_forward.1} parent=0 // pred_region
    _
  $region21: #{linear_classifier_forward.1} parent=0 // pred_fallthru
    _
  %v20 = vld [vmem:[%s0] sm:$0xff]
  %v21 = vld [vmem:[%s0 + $0x8] sm:$0xff]
  %v22 = vld [vmem:[%s1] sm:$0xff]
  %v23 = vld [vmem:[%s1 + $0x8] sm:$0xff]
  %v24 = vld [vmem:[%s1 + $0x10] sm:$0xff]
  %v25 = vld [vmem:[%s1 + $0x18] sm:$0xff]
  %v26 = vld [vmem:[%s1 + $0x20] sm:$0xff]
  %v27 = vld [vmem:[%s1 + $0x28] sm:$0xff]
  %v28 = vld [vmem:[%s1 + $0x30] sm:$0xff]
  %v29 = vld [vmem:[%s1 + $0x38] sm:$0xff]
  %v30 = vld [vmem:[%s1 + $0x40] sm:$0xff]
  %v31 = vld [vmem:[%s1 + $0x48] sm:$0xff]
  %v32 = vld [vmem:[%s1 + $0x50] sm:$0xff]
  %v33 = vld [vmem:[%s1 + $0x58] sm:$0xff]
  %v34 = vld [vmem:[%s1 + $0x60] sm:$0xff]
  %v35 = vld [vmem:[%s1 + $0x68] sm:$0xff]
  %v36 = vld [vmem:[%s1 + $0x70] sm:$0xff]
  %v37 = vld [vmem:[%s1 + $0x78] sm:$0xff]
  %v38 = vld [vmem:[%s1 + $0x80] sm:$0xff]
  %v39 = vld [vmem:[%s1 + $0x88] sm:$0xff]
  %v40 = vld [vmem:[%s1 + $0x90] sm:$0xff]
  %v41 = vld [vmem:[%s1 + $0x98] sm:$0xff]
  %v42 = vld [vmem:[%s1 + $0xa0] sm:$0xff]
  %v43 = vld [vmem:[%s1 + $0xa8] sm:$0xff]
  %v44 = vld [vmem:[%s1 + $0xb0] sm:$0xff]
  %v45 = vld [vmem:[%s1 + $0xb8] sm:$0xff]
  %v46 = vld [vmem:[%s1 + $0xc0] sm:$0xff]
  %v47 = vld [vmem:[%s1 + $0xc8] sm:$0xff]
  %v48 = vld [vmem:[%s1 + $0xd0] sm:$0xff]
  %v49 = vld [vmem:[%s1 + $0xd8] sm:$0xff]
  %v50 = vld [vmem:[%s1 + $0xe0] sm:$0xff]
  %v51 = vld [vmem:[%s1 + $0xe8] sm:$0xff]
  %v52 = vld [vmem:[%s1 + $0xf0] sm:$0xff]
  %v53 = vld [vmem:[%s1 + $0xf8] sm:$0xff]
  %v54 = vld [vmem:[%s1 + $0x100] sm:$0xff]
  %v55 = vld [vmem:[%s1 + $0x108] sm:$0xff]
  %v56 = vld [vmem:[%s1 + $0x110] sm:$0xff]
  %v57 = vld [vmem:[%s1 + $0x118] sm:$0xff]
  %v58 = vld [vmem:[%s1 + $0x120] sm:$0xff]
  %v59 = vld [vmem:[%s1 + $0x128] sm:$0xff]
  %v60 = vld [vmem:[%s1 + $0x130] sm:$0xff]
  %v61 = vld [vmem:[%s1 + $0x138] sm:$0xff]
  %v62 = vld [vmem:[%s1 + $0x140] sm:$0xff]
  %v63 = vld [vmem:[%s1 + $0x148] sm:$0xff]
  %v64 = vld [vmem:[%s1 + $0x150] sm:$0xff]
  %v65 = vld [vmem:[%s1 + $0x158] sm:$0xff]
  %v66 = vld [vmem:[%s1 + $0x160] sm:$0xff]
  %v67 = vld [vmem:[%s1 + $0x168] sm:$0xff]
  %v68 = vld [vmem:[%s1 + $0x170] sm:$0xff]
  %v69 = vld [vmem:[%s1 + $0x178] sm:$0xff]
  %v70 = vld [vmem:[%s1 + $0x180] sm:$0xff]
  %v71 = vld [vmem:[%s1 + $0x188] sm:$0xff]
  %v72 = vld [vmem:[%s1 + $0x190] sm:$0xff]
  %v73 = vld [vmem:[%s1 + $0x198] sm:$0xff]
  %v74 = vld [vmem:[%s1 + $0x1a0] sm:$0xff]
  %v75 = vld [vmem:[%s1 + $0x1a8] sm:$0xff]
  %v76 = vld [vmem:[%s1 + $0x1b0] sm:$0xff]
  %v77 = vld [vmem:[%s1 + $0x1b8] sm:$0xff]
  %v78 = vld [vmem:[%s1 + $0x1c0] sm:$0xff]
  %v79 = vld [vmem:[%s1 + $0x1c8] sm:$0xff]
  %v80 = vld [vmem:[%s1 + $0x1d0] sm:$0xff]
  %v81 = vld [vmem:[%s1 + $0x1d8] sm:$0xff]
  %v82 = vld [vmem:[%s1 + $0x1e0] sm:$0xff]
  %v83 = vld [vmem:[%s1 + $0x1e8] sm:$0xff]
  %v84 = vld [vmem:[%s1 + $0x1f0] sm:$0xff]
  %v85 = vld [vmem:[%s1 + $0x1f8] sm:$0xff]
  %v86 = vld [vmem:[%s2] sm:$0x3]
  %v88 = vperm.slane %v86, 0
  %v89 = vperm.slane %v86, 1
  %v94 = vunpack.c.l.b16 %v20
  %v95 = vunpack.c.h.b16 %v20
  %v96 = vunpack.c.l.b16 %v21
  %v97 = vunpack.c.h.b16 %v21
  %v98 = vpack.c.b16 %v94, %v94
  %v99 = vpack.c.b16 %v95, %v95
  %v100 = vpack.c.b16 %v96, %v96
  %v101 = vpack.c.b16 %v97, %v97
  %v170 = vunpack.c.l.b16 %v22
  %v171 = vunpack.c.h.b16 %v22
  %v172 = vunpack.c.l.b16 %v23
  %v173 = vunpack.c.h.b16 %v23
  %v174 = vunpack.c.l.b16 %v24
  %v175 = vunpack.c.h.b16 %v24
  %v176 = vunpack.c.l.b16 %v25
  %v177 = vunpack.c.h.b16 %v25
  %v178 = vunpack.c.l.b16 %v26
  %v179 = vunpack.c.h.b16 %v26
  %v180 = vunpack.c.l.b16 %v27
  %v181 = vunpack.c.h.b16 %v27
  %v182 = vunpack.c.l.b16 %v28
  %v183 = vunpack.c.h.b16 %v28
  %v184 = vunpack.c.l.b16 %v29
  %v185 = vunpack.c.h.b16 %v29
  %v186 = vunpack.c.l.b16 %v30
  %v187 = vunpack.c.h.b16 %v30
  %v188 = vunpack.c.l.b16 %v31
  %v189 = vunpack.c.h.b16 %v31
  %v190 = vunpack.c.l.b16 %v32
  %v191 = vunpack.c.h.b16 %v32
  %v192 = vunpack.c.l.b16 %v33
  %v193 = vunpack.c.h.b16 %v33
  %v194 = vunpack.c.l.b16 %v34
  %v195 = vunpack.c.h.b16 %v34
  %v196 = vunpack.c.l.b16 %v35
  %v197 = vunpack.c.h.b16 %v35
  %v198 = vunpack.c.l.b16 %v36
  %v199 = vunpack.c.h.b16 %v36
  %v200 = vunpack.c.l.b16 %v37
  %v201 = vunpack.c.h.b16 %v37
  %v202 = vunpack.c.l.b16 %v38
  %v203 = vunpack.c.h.b16 %v38
  %v204 = vunpack.c.l.b16 %v39
  %v205 = vunpack.c.h.b16 %v39
  %v206 = vunpack.c.l.b16 %v40
  %v207 = vunpack.c.h.b16 %v40
  %v208 = vunpack.c.l.b16 %v41
  %v209 = vunpack.c.h.b16 %v41
  %v210 = vunpack.c.l.b16 %v42
  %v211 = vunpack.c.h.b16 %v42
  %v212 = vunpack.c.l.b16 %v43
  %v213 = vunpack.c.h.b16 %v43
  %v214 = vunpack.c.l.b16 %v44
  %v215 = vunpack.c.h.b16 %v44
  %v216 = vunpack.c.l.b16 %v45
  %v217 = vunpack.c.h.b16 %v45
  %v218 = vunpack.c.l.b16 %v46
  %v219 = vunpack.c.h.b16 %v46
  %v220 = vunpack.c.l.b16 %v47
  %v221 = vunpack.c.h.b16 %v47
  %v222 = vunpack.c.l.b16 %v48
  %v223 = vunpack.c.h.b16 %v48
  %v224 = vunpack.c.l.b16 %v49
  %v225 = vunpack.c.h.b16 %v49
  %v226 = vunpack.c.l.b16 %v50
  %v227 = vunpack.c.h.b16 %v50
  %v228 = vunpack.c.l.b16 %v51
  %v229 = vunpack.c.h.b16 %v51
  %v230 = vunpack.c.l.b16 %v52
  %v231 = vunpack.c.h.b16 %v52
  %v232 = vunpack.c.l.b16 %v53
  %v233 = vunpack.c.h.b16 %v53
  %v234 = vunpack.c.l.b16 %v54
  %v235 = vunpack.c.h.b16 %v54
  %v236 = vunpack.c.l.b16 %v55
  %v237 = vunpack.c.h.b16 %v55
  %v238 = vunpack.c.l.b16 %v56
  %v239 = vunpack.c.h.b16 %v56
  %v240 = vunpack.c.l.b16 %v57
  %v241 = vunpack.c.h.b16 %v57
  %v242 = vunpack.c.l.b16 %v58
  %v243 = vunpack.c.h.b16 %v58
  %v244 = vunpack.c.l.b16 %v59
  %v245 = vunpack.c.h.b16 %v59
  %v246 = vunpack.c.l.b16 %v60
  %v247 = vunpack.c.h.b16 %v60
  %v248 = vunpack.c.l.b16 %v61
  %v249 = vunpack.c.h.b16 %v61
  %v250 = vunpack.c.l.b16 %v62
  %v251 = vunpack.c.h.b16 %v62
  %v252 = vunpack.c.l.b16 %v63
  %v253 = vunpack.c.h.b16 %v63
  %v254 = vunpack.c.l.b16 %v64
  %v255 = vunpack.c.h.b16 %v64
  %v256 = vunpack.c.l.b16 %v65
  %v257 = vunpack.c.h.b16 %v65
  %v258 = vunpack.c.l.b16 %v66
  %v259 = vunpack.c.h.b16 %v66
  %v260 = vunpack.c.l.b16 %v67
  %v261 = vunpack.c.h.b16 %v67
  %v262 = vunpack.c.l.b16 %v68
  %v263 = vunpack.c.h.b16 %v68
  %v264 = vunpack.c.l.b16 %v69
  %v265 = vunpack.c.h.b16 %v69
  %v266 = vunpack.c.l.b16 %v70
  %v267 = vunpack.c.h.b16 %v70
  %v268 = vunpack.c.l.b16 %v71
  %v269 = vunpack.c.h.b16 %v71
  %v270 = vunpack.c.l.b16 %v72
  %v271 = vunpack.c.h.b16 %v72
  %v272 = vunpack.c.l.b16 %v73
  %v273 = vunpack.c.h.b16 %v73
  %v274 = vunpack.c.l.b16 %v74
  %v275 = vunpack.c.h.b16 %v74
  %v276 = vunpack.c.l.b16 %v75
  %v277 = vunpack.c.h.b16 %v75
  %v278 = vunpack.c.l.b16 %v76
  %v279 = vunpack.c.h.b16 %v76
  %v280 = vunpack.c.l.b16 %v77
  %v281 = vunpack.c.h.b16 %v77
  %v282 = vunpack.c.l.b16 %v78
  %v283 = vunpack.c.h.b16 %v78
  %v284 = vunpack.c.l.b16 %v79
  %v285 = vunpack.c.h.b16 %v79
  %v286 = vunpack.c.l.b16 %v80
  %v287 = vunpack.c.h.b16 %v80
  %v288 = vunpack.c.l.b16 %v81
  %v289 = vunpack.c.h.b16 %v81
  %v290 = vunpack.c.l.b16 %v82
  %v291 = vunpack.c.h.b16 %v82
  %v292 = vunpack.c.l.b16 %v83
  %v293 = vunpack.c.h.b16 %v83
  %v294 = vunpack.c.l.b16 %v84
  %v295 = vunpack.c.h.b16 %v84
  %v296 = vunpack.c.l.b16 %v85
  %v297 = vunpack.c.h.b16 %v85
  %v298 = vpack.c.b16 %v172, %v170
  %v299 = vpack.c.b16 %v173, %v171
  %v300 = vpack.c.b16 %v176, %v174
  %v301 = vpack.c.b16 %v177, %v175
  %v302 = vpack.c.b16 %v180, %v178
  %v303 = vpack.c.b16 %v181, %v179
  %v304 = vpack.c.b16 %v184, %v182
  %v305 = vpack.c.b16 %v185, %v183
  %v306 = vpack.c.b16 %v188, %v186
  %v307 = vpack.c.b16 %v189, %v187
  %v308 = vpack.c.b16 %v192, %v190
  %v309 = vpack.c.b16 %v193, %v191
  %v310 = vpack.c.b16 %v196, %v194
  %v311 = vpack.c.b16 %v197, %v195
  %v312 = vpack.c.b16 %v200, %v198
  %v313 = vpack.c.b16 %v201, %v199
  %v314 = vpack.c.b16 %v204, %v202
  %v315 = vpack.c.b16 %v205, %v203
  %v316 = vpack.c.b16 %v208, %v206
  %v317 = vpack.c.b16 %v209, %v207
  %v318 = vpack.c.b16 %v212, %v210
  %v319 = vpack.c.b16 %v213, %v211
  %v320 = vpack.c.b16 %v216, %v214
  %v321 = vpack.c.b16 %v217, %v215
  %v322 = vpack.c.b16 %v220, %v218
  %v323 = vpack.c.b16 %v221, %v219
  %v324 = vpack.c.b16 %v224, %v222
  %v325 = vpack.c.b16 %v225, %v223
  %v326 = vpack.c.b16 %v228, %v226
  %v327 = vpack.c.b16 %v229, %v227
  %v328 = vpack.c.b16 %v232, %v230
  %v329 = vpack.c.b16 %v233, %v231
  %v330 = vpack.c.b16 %v236, %v234
  %v331 = vpack.c.b16 %v237, %v235
  %v332 = vpack.c.b16 %v240, %v238
  %v333 = vpack.c.b16 %v241, %v239
  %v334 = vpack.c.b16 %v244, %v242
  %v335 = vpack.c.b16 %v245, %v243
  %v336 = vpack.c.b16 %v248, %v246
  %v337 = vpack.c.b16 %v249, %v247
  %v338 = vpack.c.b16 %v252, %v250
  %v339 = vpack.c.b16 %v253, %v251
  %v340 = vpack.c.b16 %v256, %v254
  %v341 = vpack.c.b16 %v257, %v255
  %v342 = vpack.c.b16 %v260, %v258
  %v343 = vpack.c.b16 %v261, %v259
  %v344 = vpack.c.b16 %v264, %v262
  %v345 = vpack.c.b16 %v265, %v263
  %v346 = vpack.c.b16 %v268, %v266
  %v347 = vpack.c.b16 %v269, %v267
  %v348 = vpack.c.b16 %v272, %v270
  %v349 = vpack.c.b16 %v273, %v271
  %v350 = vpack.c.b16 %v276, %v274
  %v351 = vpack.c.b16 %v277, %v275
  %v352 = vpack.c.b16 %v280, %v278
  %v353 = vpack.c.b16 %v281, %v279
  %v354 = vpack.c.b16 %v284, %v282
  %v355 = vpack.c.b16 %v285, %v283
  %v356 = vpack.c.b16 %v288, %v286
  %v357 = vpack.c.b16 %v289, %v287
  %v358 = vpack.c.b16 %v292, %v290
  %v359 = vpack.c.b16 %v293, %v291
  %v360 = vpack.c.b16 %v296, %v294
  %v361 = vpack.c.b16 %v297, %v295
  %426 = vmatpush.bf16.msra.mxu0 %v312
  %427 = vmatpush.bf16.msra.mxu0 %v310
  %428 = vmatpush.bf16.msra.mxu0 %v308
  %429 = vmatpush.bf16.msra.mxu0 %v306
  %430 = vmatpush.bf16.msra.mxu0 %v304
  %431 = vmatpush.bf16.msra.mxu0 %v302
  %432 = vmatpush.bf16.msra.mxu0 %v300
  %433 = vmatpush.bf16.msra.mxu0 %v298
  %434 = vmatmul.bf16.gmra.mxu0 %v98
  %v435 = vpop.f32.mrf.mxu0
  %v436 = vadd.f32 %v88, %v435
  %v437 = vpop.f32.mrf.mxu0
  %438 = vdwg.mxu0
  %439 = vmatpush.bf16.msra.mxu0 %v328
  %440 = vmatpush.bf16.msra.mxu0 %v326
  %441 = vmatpush.bf16.msra.mxu0 %v324
  %442 = vmatpush.bf16.msra.mxu0 %v322
  %443 = vmatpush.bf16.msra.mxu0 %v320
  %444 = vmatpush.bf16.msra.mxu0 %v318
  %445 = vmatpush.bf16.msra.mxu0 %v316
  %446 = vmatpush.bf16.msra.mxu0 %v314
  %447 = vmatmul.bf16.gmra.mxu0 %v99
  %v448 = vpop.f32.mrf.mxu0
  %v449 = vadd.f32 %v436, %v448
  %v450 = vpop.f32.mrf.mxu0
  %451 = vdwg.mxu0
  %452 = vmatpush.bf16.msra.mxu0 %v344
  %453 = vmatpush.bf16.msra.mxu0 %v342
  %454 = vmatpush.bf16.msra.mxu0 %v340
  %455 = vmatpush.bf16.msra.mxu0 %v338
  %456 = vmatpush.bf16.msra.mxu0 %v336
  %457 = vmatpush.bf16.msra.mxu0 %v334
  %458 = vmatpush.bf16.msra.mxu0 %v332
  %459 = vmatpush.bf16.msra.mxu0 %v330
  %460 = vmatmul.bf16.gmra.mxu0 %v100
  %v461 = vpop.f32.mrf.mxu0
  %v462 = vadd.f32 %v449, %v461
  %v463 = vpop.f32.mrf.mxu0
  %464 = vdwg.mxu0
  %465 = vmatpush.bf16.msra.mxu0 %v360
  %466 = vmatpush.bf16.msra.mxu0 %v358
  %467 = vmatpush.bf16.msra.mxu0 %v356
  %468 = vmatpush.bf16.msra.mxu0 %v354
  %469 = vmatpush.bf16.msra.mxu0 %v352
  %470 = vmatpush.bf16.msra.mxu0 %v350
  %471 = vmatpush.bf16.msra.mxu0 %v348
  %472 = vmatpush.bf16.msra.mxu0 %v346
  %473 = vmatmul.bf16.gmra.mxu0 %v101
  %v474 = vpop.f32.mrf.mxu0
  %v475 = vadd.f32 %v462, %v474
  %v476 = vpop.f32.mrf.mxu0
  %477 = vdwg.mxu0
  %478 = vmatpush.bf16.msra.mxu0 %v313
  %479 = vmatpush.bf16.msra.mxu0 %v311
  %480 = vmatpush.bf16.msra.mxu0 %v309
  %481 = vmatpush.bf16.msra.mxu0 %v307
  %482 = vmatpush.bf16.msra.mxu0 %v305
  %483 = vmatpush.bf16.msra.mxu0 %v303
  %484 = vmatpush.bf16.msra.mxu0 %v301
  %485 = vmatpush.bf16.msra.mxu0 %v299
  %486 = vmatmul.bf16.gmra.mxu0 %v98
  %v487 = vpop.f32.mrf.mxu0
  %v488 = vadd.f32 %v89, %v487
  %v489 = vpop.f32.mrf.mxu0
  %490 = vdwg.mxu0
  %491 = vmatpush.bf16.msra.mxu0 %v329
  %492 = vmatpush.bf16.msra.mxu0 %v327
  %493 = vmatpush.bf16.msra.mxu0 %v325
  %494 = vmatpush.bf16.msra.mxu0 %v323
  %495 = vmatpush.bf16.msra.mxu0 %v321
  %496 = vmatpush.bf16.msra.mxu0 %v319
  %497 = vmatpush.bf16.msra.mxu0 %v317
  %498 = vmatpush.bf16.msra.mxu0 %v315
  %499 = vmatmul.bf16.gmra.mxu0 %v99
  %v500 = vpop.f32.mrf.mxu0
  %v501 = vadd.f32 %v488, %v500
  %v502 = vpop.f32.mrf.mxu0
  %503 = vdwg.mxu0
  %504 = vmatpush.bf16.msra.mxu0 %v345
  %505 = vmatpush.bf16.msra.mxu0 %v343
  %506 = vmatpush.bf16.msra.mxu0 %v341
  %507 = vmatpush.bf16.msra.mxu0 %v339
  %508 = vmatpush.bf16.msra.mxu0 %v337
  %509 = vmatpush.bf16.msra.mxu0 %v335
  %510 = vmatpush.bf16.msra.mxu0 %v333
  %511 = vmatpush.bf16.msra.mxu0 %v331
  %512 = vmatmul.bf16.gmra.mxu0 %v100
  %v513 = vpop.f32.mrf.mxu0
  %v514 = vadd.f32 %v501, %v513
  %v515 = vpop.f32.mrf.mxu0
  %516 = vdwg.mxu0
  %517 = vmatpush.bf16.msra.mxu0 %v361
  %518 = vmatpush.bf16.msra.mxu0 %v359
  %519 = vmatpush.bf16.msra.mxu0 %v357
  %520 = vmatpush.bf16.msra.mxu0 %v355
  %521 = vmatpush.bf16.msra.mxu0 %v353
  %522 = vmatpush.bf16.msra.mxu0 %v351
  %523 = vmatpush.bf16.msra.mxu0 %v349
  %524 = vmatpush.bf16.msra.mxu0 %v347
  %525 = vmatmul.bf16.gmra.mxu0 %v101
  %v526 = vpop.f32.mrf.mxu0
  %v527 = vadd.f32 %v514, %v526
  %v528 = vpop.f32.mrf.mxu0
  %529 = vdwg.mxu0
  %v530 = vmax.f32 %v475, 0.0
  %v531 = vmax.f32 %v527, 0.0
  %v532 = vpack.c.bf16 %v530, %v530
  %v533 = vpack.c.bf16 %v531, %v531
  %v534 = vld [vmem:[%s3] sm:$0xf]
  %v535 = vld [vmem:[%s3 + $0x4] sm:$0xf]
  %v536 = vld [vmem:[%s3 + $0x8] sm:$0xf]
  %v537 = vld [vmem:[%s3 + $0xc] sm:$0xf]
  %v538 = vld [vmem:[%s3 + $0x10] sm:$0xf]
  %v539 = vld [vmem:[%s3 + $0x14] sm:$0xf]
  %v540 = vld [vmem:[%s3 + $0x18] sm:$0xf]
  %v541 = vld [vmem:[%s3 + $0x1c] sm:$0xf]
  %v542 = vld [vmem:[%s3 + $0x20] sm:$0xf]
  %v543 = vld [vmem:[%s3 + $0x24] sm:$0xf]
  %v544 = vld [vmem:[%s3 + $0x28] sm:$0xf]
  %v545 = vld [vmem:[%s3 + $0x2c] sm:$0xf]
  %v546 = vld [vmem:[%s3 + $0x30] sm:$0xf]
  %v547 = vld [vmem:[%s3 + $0x34] sm:$0xf]
  %v548 = vld [vmem:[%s3 + $0x38] sm:$0xf]
  %v549 = vld [vmem:[%s3 + $0x3c] sm:$0xf]
  %v550 = vld [vmem:[%s3 + $0x40] sm:$0xf]
  %v551 = vld [vmem:[%s3 + $0x44] sm:$0xf]
  %v552 = vld [vmem:[%s3 + $0x48] sm:$0xf]
  %v553 = vld [vmem:[%s3 + $0x4c] sm:$0xf]
  %v554 = vld [vmem:[%s3 + $0x50] sm:$0xf]
  %v555 = vld [vmem:[%s3 + $0x54] sm:$0xf]
  %v556 = vld [vmem:[%s3 + $0x58] sm:$0xf]
  %v557 = vld [vmem:[%s3 + $0x5c] sm:$0xf]
  %v558 = vld [vmem:[%s3 + $0x60] sm:$0xf]
  %v559 = vld [vmem:[%s3 + $0x64] sm:$0xf]
  %v560 = vld [vmem:[%s3 + $0x68] sm:$0xf]
  %v561 = vld [vmem:[%s3 + $0x6c] sm:$0xf]
  %v562 = vld [vmem:[%s3 + $0x70] sm:$0xf]
  %v563 = vld [vmem:[%s3 + $0x74] sm:$0xf]
  %v564 = vld [vmem:[%s3 + $0x78] sm:$0xf]
  %v565 = vld [vmem:[%s3 + $0x7c] sm:$0xf]
  %v566 = vld [vmem:[%s4] sm:$0x1]
  %v568 = vperm.slane %v566, 0
  %v602 = vunpack.c.l.b16 %v534
  %v603 = vunpack.c.l.b16 %v535
  %v604 = vunpack.c.l.b16 %v536
  %v605 = vunpack.c.l.b16 %v537
  %v606 = vunpack.c.l.b16 %v538
  %v607 = vunpack.c.l.b16 %v539
  %v608 = vunpack.c.l.b16 %v540
  %v609 = vunpack.c.l.b16 %v541
  %v610 = vunpack.c.l.b16 %v542
  %v611 = vunpack.c.l.b16 %v543
  %v612 = vunpack.c.l.b16 %v544
  %v613 = vunpack.c.l.b16 %v545
  %v614 = vunpack.c.l.b16 %v546
  %v615 = vunpack.c.l.b16 %v547
  %v616 = vunpack.c.l.b16 %v548
  %v617 = vunpack.c.l.b16 %v549
  %v618 = vunpack.c.l.b16 %v550
  %v619 = vunpack.c.l.b16 %v551
  %v620 = vunpack.c.l.b16 %v552
  %v621 = vunpack.c.l.b16 %v553
  %v622 = vunpack.c.l.b16 %v554
  %v623 = vunpack.c.l.b16 %v555
  %v624 = vunpack.c.l.b16 %v556
  %v625 = vunpack.c.l.b16 %v557
  %v626 = vunpack.c.l.b16 %v558
  %v627 = vunpack.c.l.b16 %v559
  %v628 = vunpack.c.l.b16 %v560
  %v629 = vunpack.c.l.b16 %v561
  %v630 = vunpack.c.l.b16 %v562
  %v631 = vunpack.c.l.b16 %v563
  %v632 = vunpack.c.l.b16 %v564
  %v633 = vunpack.c.l.b16 %v565
  %v634 = vpack.c.b16 %v603, %v602
  %v635 = vpack.c.b16 %v605, %v604
  %v636 = vpack.c.b16 %v607, %v606
  %v637 = vpack.c.b16 %v609, %v608
  %v638 = vpack.c.b16 %v611, %v610
  %v639 = vpack.c.b16 %v613, %v612
  %v640 = vpack.c.b16 %v615, %v614
  %v641 = vpack.c.b16 %v617, %v616
  %v642 = vpack.c.b16 %v619, %v618
  %v643 = vpack.c.b16 %v621, %v620
  %v644 = vpack.c.b16 %v623, %v622
  %v645 = vpack.c.b16 %v625, %v624
  %v646 = vpack.c.b16 %v627, %v626
  %v647 = vpack.c.b16 %v629, %v628
  %v648 = vpack.c.b16 %v631, %v630
  %v649 = vpack.c.b16 %v633, %v632
  %666 = vmatpush.bf16.msra.mxu0 %v641
  %667 = vmatpush.bf16.msra.mxu0 %v640
  %668 = vmatpush.bf16.msra.mxu0 %v639
  %669 = vmatpush.bf16.msra.mxu0 %v638
  %670 = vmatpush.bf16.msra.mxu0 %v637
  %671 = vmatpush.bf16.msra.mxu0 %v636
  %672 = vmatpush.bf16.msra.mxu0 %v635
  %673 = vmatpush.bf16.msra.mxu0 %v634
  %674 = vmatmul.bf16.gmra.mxu0 %v532
  %v675 = vpop.f32.mrf.mxu0
  %v676 = vadd.f32 %v568, %v675
  %v677 = vpop.f32.mrf.mxu0
  %678 = vdwg.mxu0
  %679 = vmatpush.bf16.msra.mxu0 %v649
  %680 = vmatpush.bf16.msra.mxu0 %v648
  %681 = vmatpush.bf16.msra.mxu0 %v647
  %682 = vmatpush.bf16.msra.mxu0 %v646
  %683 = vmatpush.bf16.msra.mxu0 %v645
  %684 = vmatpush.bf16.msra.mxu0 %v644
  %685 = vmatpush.bf16.msra.mxu0 %v643
  %686 = vmatpush.bf16.msra.mxu0 %v642
  %687 = vmatmul.bf16.gmra.mxu0 %v533
  %v688 = vpop.f32.mrf.mxu0
  %v689 = vadd.f32 %v676, %v688
  %v690 = vpop.f32.mrf.mxu0
  %691 = vdwg.mxu0
  %692 = vst [vmem:[%s5] sm:$0xff] %v689
  // Predicated region
  $region22: #{linear_classifier_forward.1} parent=0 // pred_check
    _
  $region23: #{linear_classifier_forward.1} parent=0 // pred_check_branch
    %694 = sbr.rel (0) target = $region25
  $region24: #{linear_classifier_forward.1} parent=0 // pred_region
    _
  $region25: #{linear_classifier_forward.1} parent=0 // pred_fallthru
    _
  // Predicated region
  $region26: #{linear_classifier_forward.1} parent=0 // pred_check
    _
  $region27: #{linear_classifier_forward.1} parent=0 // pred_check_branch
    %696 = sbr.rel (0) target = $region29
  $region28: #{linear_classifier_forward.1} parent=0 // pred_region
    _
  $region29: #{linear_classifier_forward.1} parent=0 // pred_fallthru
    _

</llo_original>
